<compile_context>
chip_gen: v7x
topology: tpu7x:2x2x1
jax: 0.10.0
libtpu: 0.0.40
codegen_flags: <defaults>
</compile_context>

<pallas_src>
import math

import jax
import jax.numpy as jnp
from jax.experimental import pallas as pl
from jax.experimental.pallas import tpu as pltpu

C = 512  # module hard-codes nn.Linear(512 * 2, 1)


def _gating_kernel(x_ref, wx_ref, yrep_ref, gyb_ref, txt_ref, img_ref):
    """One (Tr, C) row-tile of x -> gated text / image tiles."""
    x = x_ref[...]                                     # (Tr, C) input dtype
    wx = wx_ref[...]                                   # (1, C)  f32
    xf = x.astype(jnp.float32)

    # fc(cat([x, y_mean])) = x.wx + (y_mean.wy + bias); the second term is the
    # precomputed per-row gyb_ref.  Lane reduce rides the XLU slot; sigmoid on EUP.
    gx = jnp.sum(xf * wx, axis=-1, keepdims=True)      # (Tr, 1) f32
    gate = jax.nn.sigmoid(gx + gyb_ref[...])           # (Tr, 1) f32

    # Store paths: when in/out dtype is sub-32-bit (bf16), multiply in that dtype
    # (v6e/v7x bf16 VALU) -- halves vreg footprint on the store path; only the
    # reduce/sigmoid stay in f32.  For f32 in/out this is the plain f32 path.
    if txt_ref.dtype == x.dtype and jnp.dtype(x.dtype) != jnp.dtype(jnp.float32):
        txt_ref[...] = gate.astype(x.dtype) * x
    else:
        txt_ref[...] = (gate * xf).astype(txt_ref.dtype)

    y = yrep_ref[...]                                  # (Tr, C) resident replica
    if img_ref.dtype == y.dtype and jnp.dtype(y.dtype) != jnp.dtype(jnp.float32):
        img_ref[...] = (1.0 - gate).astype(y.dtype) * y
    else:
        img_ref[...] = ((1.0 - gate) * y.astype(jnp.float32)).astype(img_ref.dtype)


def _is_dual_core_chip():
    """Best-effort v7x detection (2 TensorCores/chip)."""
    try:
        kind = jax.devices()[0].device_kind.lower()
    except Exception:  # pragma: no cover - no backend
        return False
    return "7" in kind  # "TPU v7x" / "TPU7x"; earlier generations contain no '7'


def _choose_tile_rows(rows, b, *, max_rows=1024, prefer_even_grid=False):
    """Pick a row tile that is a multiple of lcm(8, b).

    Prefers exact divisors of `rows` (no padding).  When `prefer_even_grid`
    (v7x, 2 TensorCores), prefers tiles whose grid count is even and >= 4 so
    both cores stay loaded.  If no divisor <= cap exists, returns a tile that
    requires padding rows (handled by the wrapper), never one giant block.
    """
    step = (8 * b) // math.gcd(8, b)               # lcm(8, b)
    cap = max(step, (max_rows // step) * step)
    rows_ceil = -(-rows // step) * step
    cap = max(step, min(cap, rows_ceil))

    def grid_of(tr):
        return -(-rows // tr)

    exact = [tr for tr in range(step, cap + 1, step) if rows % tr == 0]
    if prefer_even_grid:
        pref = [tr for tr in exact if grid_of(tr) >= 4 and grid_of(tr) % 2 == 0]
        if pref:
            return max(pref)
    if exact:
        return max(exact)

    # Padding path: pick the largest tile (or, on v7x, the largest giving an
    # even grid >= 4) -- the wrapper zero-pads x and slices the outputs.
    if prefer_even_grid:
        for cand in range(cap, step - 1, -step):
            g = grid_of(cand)
            if g >= 4 and g % 2 == 0:
                return cand
    return cap


def gating_mechanism(x, y, weight, bias, *, tile_rows=None, core_parallel=None):
    """x: (t, b, 512), y: (t_img, b, 512), weight: (1, 1024), bias: (1,)."""
    t, b, c = x.shape
    ty, by, cy = y.shape
    assert c == C and cy == C and by == b and weight.shape == (1, 2 * C)

    if core_parallel is None:
        core_parallel = _is_dual_core_chip()

    rows = t * b
    if tile_rows is None:
        tile_rows = _choose_tile_rows(rows, b, prefer_even_grid=core_parallel)
    # Whole batches per tile => identical y_mean broadcast pattern every tile.
    assert tile_rows % b == 0
    # (8,128) block constraint: multiple of 8, or a single full-array block.
    assert tile_rows % 8 == 0 or tile_rows >= rows

    grid_n = -(-rows // tile_rows)
    padded_rows = grid_n * tile_rows
    grid = (grid_n,)

    out_dtype = jnp.result_type(x.dtype, y.dtype)
    # Resident replica stored in the narrower dtype when possible (trims VMEM).
    yrep_dtype = out_dtype if jnp.dtype(out_dtype).itemsize < 4 else jnp.float32

    # --- tiny y-branch precompute (y is read from HBM exactly once) --------
    wx = weight[:, :C].astype(jnp.float32)                      # (1, C)
    wy = weight[:, C:].astype(jnp.float32)                      # (1, C)
    y_mean = jnp.mean(y.astype(jnp.float32), axis=0)            # (b, C) f32
    gy = jnp.sum(y_mean * wy, axis=-1) + bias.reshape(()).astype(jnp.float32)

    # One tile's worth of the broadcast pattern (identical for every tile).
    reps = tile_rows // b
    y_rep = jnp.tile(y_mean, (reps, 1)).astype(yrep_dtype)      # (Tr, C)
    gyb_rep = jnp.tile(gy, reps).reshape(tile_rows, 1)          # (Tr, 1) f32
    # NOTE: (Tr,1) block is lane-padded to 128 in VMEM (~Tr*512B/buf) -- counted
    # in the budget, negligible at Tr<=1024.

    # Lane/sublane-dense 2-D slab; pad rows if the tile does not divide them.
    x2 = x.reshape(rows, C)
    if padded_rows != rows:
        x2 = jnp.pad(x2, ((0, padded_rows - rows), (0, 0)))

    in_itemsize = jnp.dtype(x.dtype).itemsize
    out_itemsize = jnp.dtype(out_dtype).itemsize
    cost = pl.CostEstimate(
        flops=4 * padded_rows * C,
        transcendentals=padded_rows,
        bytes_accessed=(padded_rows * C * in_itemsize                    # x read
                        + y_rep.size * jnp.dtype(yrep_dtype).itemsize
                        + gyb_rep.size * 4 + wx.size * 4
                        + 2 * padded_rows * C * out_itemsize),           # outputs
    )

    def _run(dim_semantics):
        return pl.pallas_call(
            _gating_kernel,
            out_shape=(jax.ShapeDtypeStruct((padded_rows, C), out_dtype),
                       jax.ShapeDtypeStruct((padded_rows, C), out_dtype)),
            grid_spec=pltpu.PrefetchScalarGridSpec(
                num_scalar_prefetch=0,
                grid=grid,
                in_specs=[
                    pl.BlockSpec((tile_rows, C), lambda i: (i, 0)),   # x (streamed)
                    pl.BlockSpec((1, C), lambda i: (0, 0)),           # wx (resident)
                    pl.BlockSpec((tile_rows, C), lambda i: (0, 0)),   # y_rep (resident)
                    pl.BlockSpec((tile_rows, 1), lambda i: (0, 0)),   # gy+bias (resident)
                ],
                out_specs=(
                    pl.BlockSpec((tile_rows, C), lambda i: (i, 0)),
                    pl.BlockSpec((tile_rows, C), lambda i: (i, 0)),
                ),
            ),
            compiler_params=pltpu.CompilerParams(
                dimension_semantics=dim_semantics,
                # 32 MiB: raises v5e's 16 MiB scoped default, fits Tr<=1024 budget
                # (~17 MiB), and leaves headroom inside v7x's 64 MiB physical VMEM.
                vmem_limit_bytes=32 * 1024 * 1024,
            ),
            cost_estimate=cost,
        )(x2, wx, y_rep, gyb_rep)

    # v7x: shard the row axis across both TensorCores; elsewhere plain "parallel".
    dim_semantics = (pltpu.CORE_PARALLEL,) if core_parallel else ("parallel",)
    try:
        txt2, img2 = _run(dim_semantics)
    except Exception:
        if core_parallel:
            # Safe fallback if CORE_PARALLEL does not lower on this chip/toolchain.
            txt2, img2 = _run(("parallel",))
        else:
            raise

    if padded_rows != rows:
        txt2 = txt2[:rows]
        img2 = img2[:rows]
    return txt2.reshape(t, b, C), img2.reshape(t, b, C)


def _reference(x, y, weight, bias):
    y_mean = jnp.mean(y, axis=0, keepdims=True)                # (1, b, c)
    t = x.shape[0]
    y_exp = jnp.broadcast_to(y_mean, (t,) + y_mean.shape[1:])  # (t, b, c)
    merge = jnp.concatenate([x, y_exp], axis=-1)               # (t, b, 2c)
    gate = jax.nn.sigmoid(merge @ weight.T + bias)             # (t, b, 1)
    return gate * x, (1.0 - gate) * y_exp


if __name__ == "__main__":
    key = jax.random.PRNGKey(0)
    kx, ky, kw, kb = jax.random.split(key, 4)

    # Deterministic init matching nn.Linear default: U(-1/sqrt(fan_in), +1/sqrt(fan_in))
    bound = 1.0 / math.sqrt(2 * C)
    weight = jax.random.uniform(kw, (1, 2 * C), jnp.float32, -bound, bound)
    bias = jax.random.uniform(kb, (1,), jnp.float32, -bound, bound)

    # --- case 1: explicit small tile (16 rows -> 4 grid steps) to exercise the
    #     software pipeline even at this tiny demo size. ---
    t, ty, b = 16, 6, 4
    x = jax.random.normal(kx, (t, b, C), dtype=jnp.float32)
    y = jax.random.normal(ky, (ty, b, C), dtype=jnp.float32)
    gated_text, gated_image = gating_mechanism(x, y, weight, bias, tile_rows=16)
    jax.block_until_ready((gated_text, gated_image))
    ref_text, ref_image = _reference(x, y, weight, bias)
    assert jnp.allclose(gated_text, ref_text, atol=1e-5, rtol=1e-5)
    assert jnp.allclose(gated_image, ref_image, atol=1e-5, rtol=1e-5)

    # --- case 2: auto tile selection + row-padding path (t*b=15 is not a
    #     multiple of lcm(8, b)=24), verifying the robust fallback. ---
    t2, ty2, b2 = 5, 3, 3
    x_b = jax.random.normal(kx, (t2, b2, C), dtype=jnp.float32)
    y_b = jax.random.normal(ky, (ty2, b2, C), dtype=jnp.float32)
    txt_b, img_b = gating_mechanism(x_b, y_b, weight, bias)
    jax.block_until_ready((txt_b, img_b))
    ref_tb, ref_ib = _reference(x_b, y_b, weight, bias)
    assert jnp.allclose(txt_b, ref_tb, atol=1e-5, rtol=1e-5)
    assert jnp.allclose(img_b, ref_ib, atol=1e-5, rtol=1e-5)

    print("KERNEL_OK")
</pallas_src>

<mosaic_0001>
module attributes {stable_mosaic.version = 11 : i64} {
  func.func @_gating_kernel(%arg0: i32, %arg1: memref<16x512xf32, #tpu.memory_space<vmem>>, %arg2: memref<1x512xf32, #tpu.memory_space<vmem>>, %arg3: memref<16x512xf32, #tpu.memory_space<vmem>>, %arg4: memref<16x1xf32, #tpu.memory_space<vmem>>, %arg5: memref<16x512xf32, #tpu.memory_space<vmem>>, %arg6: memref<16x512xf32, #tpu.memory_space<vmem>>) attributes {dimension_semantics = [#tpu.dimension_semantics<parallel>], iteration_bounds = array<i64: 4>, scalar_prefetch = 0 : i64, scratch_operands = 0 : i64, tpu.core_type = #tpu.core_type<tc>, window_params = [{transform_indices = @transform_0, window_bounds = array<i64: 16, 512>}, {pipeline_mode = #tpu.pipeline_mode<synchronous>, transform_indices = @transform_1, window_bounds = array<i64: 1, 512>}, {pipeline_mode = #tpu.pipeline_mode<synchronous>, transform_indices = @transform_2, window_bounds = array<i64: 16, 512>}, {pipeline_mode = #tpu.pipeline_mode<synchronous>, transform_indices = @transform_3, window_bounds = array<i64: 16, 1>}, {transform_indices = @transform_4, window_bounds = array<i64: 16, 512>}, {transform_indices = @transform_5, window_bounds = array<i64: 16, 512>}]} {
    %c0 = arith.constant 0 : index
    %c0_0 = arith.constant 0 : index
    %0 = vector.load %arg1[%c0, %c0_0] : memref<16x512xf32, #tpu.memory_space<vmem>>, vector<16x512xf32>
    %c0_1 = arith.constant 0 : index
    %c0_2 = arith.constant 0 : index
    %1 = vector.load %arg2[%c0_1, %c0_2] : memref<1x512xf32, #tpu.memory_space<vmem>>, vector<1x512xf32>
    %2 = vector.broadcast %1 : vector<1x512xf32> to vector<16x512xf32>
    %3 = arith.mulf %0, %2 : vector<16x512xf32>
    %cst = arith.constant dense<0.000000e+00> : vector<16xf32>
    %4 = vector.multi_reduction <add>, %3, %cst [1] : vector<16x512xf32> to vector<16xf32>
    %5 = vector.shape_cast %4 : vector<16xf32> to vector<16x1xf32>
    %c0_3 = arith.constant 0 : index
    %c0_4 = arith.constant 0 : index
    %6 = vector.load %arg4[%c0_3, %c0_4] : memref<16x1xf32, #tpu.memory_space<vmem>>, vector<16x1xf32>
    %7 = arith.addf %5, %6 : vector<16x1xf32>
    %8 = arith.negf %7 : vector<16x1xf32>
    %9 = math.exp %8 : vector<16x1xf32>
    %cst_5 = arith.constant 1.000000e+00 : f32
    %10 = vector.broadcast %cst_5 : f32 to vector<16x1xf32>
    %11 = arith.addf %10, %9 : vector<16x1xf32>
    %12 = arith.divf %10, %11 : vector<16x1xf32>
    %13 = vector.broadcast %12 : vector<16x1xf32> to vector<16x512xf32>
    %14 = arith.mulf %13, %0 : vector<16x512xf32>
    %c0_6 = arith.constant 0 : index
    %c0_7 = arith.constant 0 : index
    %15 = vector.load %arg5[%c0_6, %c0_7] : memref<16x512xf32, #tpu.memory_space<vmem>>, vector<16x512xf32>
    tpu.vector_store %arg5[%c0_6, %c0_7], %14 {strides = array<i32>} : memref<16x512xf32, #tpu.memory_space<vmem>>, vector<16x512xf32>,
    %c0_8 = arith.constant 0 : index
    %c0_9 = arith.constant 0 : index
    %16 = vector.load %arg3[%c0_8, %c0_9] : memref<16x512xf32, #tpu.memory_space<vmem>>, vector<16x512xf32>
    %cst_10 = arith.constant 1.000000e+00 : f32
    %17 = vector.broadcast %cst_10 : f32 to vector<16x1xf32>
    %18 = arith.subf %17, %12 : vector<16x1xf32>
    %19 = vector.broadcast %18 : vector<16x1xf32> to vector<16x512xf32>
    %20 = arith.mulf %19, %16 : vector<16x512xf32>
    %c0_11 = arith.constant 0 : index
    %c0_12 = arith.constant 0 : index
    %21 = vector.load %arg6[%c0_11, %c0_12] : memref<16x512xf32, #tpu.memory_space<vmem>>, vector<16x512xf32>
    tpu.vector_store %arg6[%c0_11, %c0_12], %20 {strides = array<i32>} : memref<16x512xf32, #tpu.memory_space<vmem>>, vector<16x512xf32>,
    return
  }
  func.func @transform_0(%arg0: i32) -> (i32, i32) {
    %c0_i32 = arith.constant 0 : i32
    %c0_i32_0 = arith.constant 0 : i32
    return %arg0, %c0_i32 : i32, i32
  }
  func.func @transform_1(%arg0: i32) -> (i32, i32) {
    %c0_i32 = arith.constant 0 : i32
    %c0_i32_0 = arith.constant 0 : i32
    %c0_i32_1 = arith.constant 0 : i32
    return %c0_i32, %c0_i32_0 : i32, i32
  }
  func.func @transform_2(%arg0: i32) -> (i32, i32) {
    %c0_i32 = arith.constant 0 : i32
    %c0_i32_0 = arith.constant 0 : i32
    %c0_i32_1 = arith.constant 0 : i32
    return %c0_i32, %c0_i32_0 : i32, i32
  }
  func.func @transform_3(%arg0: i32) -> (i32, i32) {
    %c0_i32 = arith.constant 0 : i32
    %c0_i32_0 = arith.constant 0 : i32
    %c0_i32_1 = arith.constant 0 : i32
    return %c0_i32, %c0_i32_0 : i32, i32
  }
  func.func @transform_4(%arg0: i32) -> (i32, i32) {
    %c0_i32 = arith.constant 0 : i32
    %c0_i32_0 = arith.constant 0 : i32
    return %arg0, %c0_i32 : i32, i32
  }
  func.func @transform_5(%arg0: i32) -> (i32, i32) {
    %c0_i32 = arith.constant 0 : i32
    %c0_i32_0 = arith.constant 0 : i32
    return %arg0, %c0_i32 : i32, i32
  }
}

</mosaic_0001>

<llo_original>
// kernel: tpu_custom_call.1
$region0: #{tpu_custom_call.1}
  #allocation0 [shape = 'u32[]', space=smem, size = 0x4, offset = 0x4, fixed_abs, tag = 'smem constant byte address 0x4 - core index']
  #allocation1 [shape = 'u32[144,128]{1,0:T(1,128)}', space=vmem, size = 0x12000, scoped, tag = 'internal scratch']
  %s0 = inlined_call_operand.hbm [shape: f32[64,512], index: 0, kind: input, shape index: {}]
  %s1 = inlined_call_operand.vmem [shape: f32[1,512], index: 1, kind: input, shape index: {}]
  %s2 = inlined_call_operand.hbm [shape: f32[16,512], index: 2, kind: input, shape index: {}]
  %s3 = inlined_call_operand.vmem [shape: f32[16,1], index: 3, kind: input, shape index: {}]
  %s4 = inlined_call_operand.hbm [shape: f32[64,512], index: 4, kind: output, shape index: {0}]
  %s5 = inlined_call_operand.hbm [shape: f32[64,512], index: 5, kind: output, shape index: {1}]
  %6 = xla_tuple %s4, %s5
  %s7 = sld [smem:[#allocation0]]
  $region65: #{tpu_custom_call.1} parent=0
    _
  %s9 = ssub.s32 1, %s7
  %s10 = scalar_select 0, %s9, %s7
  $region1: #{tpu_custom_call.1} parent=0
    #allocation2 [shape = 'u8[65536]{0}', space=vmem, size = 0x10000, scoped, tag = 'input window, operand 0']
    #allocation3 [shape = 's32[2]{0}', space=sflag, size = 0x8, scoped, tag = 'scoped memory for tpu_custom_call.1']
    #allocation4 [shape = 's32[2]{0}', space=sflag, size = 0x8, scoped, tag = 'scoped memory for tpu_custom_call.1']
    #allocation5 [shape = 'u8[32768]{0}', space=vmem, size = 0x8000, scoped, tag = 'input window, operand 2, single buffered']
    #allocation6 [shape = 's32[1]{0}', space=sflag, size = 0x4, scoped, tag = 'scoped memory for tpu_custom_call.1']
    #allocation7 [shape = 'u8[65536]{0}', space=vmem, size = 0x10000, scoped, tag = 'output window, operand 0']
    #allocation8 [shape = 'u8[65536]{0}', space=vmem, size = 0x10000, scoped, tag = 'output window, operand 1']
    #allocation9 [shape = 's32[2]{0}', space=sflag, size = 0x8, scoped, tag = 'scoped memory for tpu_custom_call.1']
    %11 = vsyncpa [#allocation3], 0
    %s12 = scalar_lea.sflag [#allocation3], 1
    %13 = vsyncpa %s12, 0
    %14 = vsyncpa [#allocation6], 0
    %15 = vsyncpa [#allocation4], 0
    %s16 = scalar_lea.sflag [#allocation4], 1
    %17 = vsyncpa %s16, 0
    %18 = vsyncpa [#allocation9], 0
    %s19 = scalar_lea.sflag [#allocation9], 1
    %20 = vsyncpa %s19, 0
    loop: start=0, step=1, limit=6
    $region2: #{tpu_custom_call.1} parent=1 // loop_pre_header
      _
    $region3: #{tpu_custom_call.1} parent=1 // loop_header
      %s22 = sphi 0, %s26
      %p23 = scmp.ge.s32.totalorder %s22, 6
      %s32 = sphi 0, %s34
      %s35 = sphi 0, %s32
      %s36 = sphi 0, %s35
      %s52 = sphi 0, %s36
      %s56 = sphi 0, %s56
      %s58 = sphi 0, %s56
      %s59 = sphi 0, %s58
      %s73 = sphi 0, %s59
      %s77 = sphi 0, %s77
      %s79 = sphi 0, %s77
      %s80 = sphi 0, %s79
      %s94 = sphi 0, %s80
      %s98 = sphi 0, %s98
      %s100 = sphi 0, %s98
      %s101 = sphi 0, %s100
      %s115 = sphi 0, %s101
      %s121 = sphi 0, %s123
      %s124 = sphi 0, %s121
      %s125 = sphi 0, %s124
      %s141 = sphi 0, %s125
      %s147 = sphi 0, %s149
      %s150 = sphi 0, %s147
      %s151 = sphi 0, %s150
      %s167 = sphi 0, %s151
    $region4: #{tpu_custom_call.1} parent=1 // loop_header_branch
      %25 = sbr.rel (%p23) target = $region8
    $region5: #{tpu_custom_call.1} parent=1 // loop_body
      %s27 = ssub.s32 %s22, 1
      %s28 = ssub.s32 %s22, 2
      %s29 = sadd.s32 %s22, 1
      %s30 = ssub.s32 %s22, %s29
      %p31 = scmp.eq.s32.totalorder %s30, 0
      %s33 = sadd.s32 %s32, 1
      %s34 = scalar_select %p31, %s32, %s33
      %p37 = pneg %p31
      %p38 = scmp.eq.s32.totalorder %s22, 3
      %p39 = por %p37, %p38
      %p40 = scmp.ne.s32.totalorder %s32, %s35
      %p41 = scmp.eq.s32.totalorder %s22, 0
      %p42 = por %p40, %p41
      %p43 = scmp.ne.s32.totalorder %s32, %s35
      %p44 = scmp.eq.s32.totalorder %s27, 3
      %p45 = por %p43, %p44
      %p46 = scmp.ne.s32.totalorder %s35, %s36
      %p47 = scmp.eq.s32.totalorder %s27, 0
      %p48 = por %p46, %p47
      %p49 = scmp.ne.s32.totalorder %s35, %s36
      %p50 = scmp.eq.s32.totalorder %s28, 3
      %p51 = por %p49, %p50
      %p53 = scmp.ne.s32.totalorder %s36, %s52
      %p54 = scmp.eq.s32.totalorder %s28, 0
      %p55 = por %p53, %p54
      %s57 = sadd.s32 %s56, 1
      %p60 = scmp.eq.s32.totalorder %s22, 3
      %p61 = scmp.ne.s32.totalorder %s56, %s58
      %p62 = scmp.eq.s32.totalorder %s22, 0
      %p63 = por %p61, %p62
      %p64 = scmp.ne.s32.totalorder %s56, %s58
      %p65 = scmp.eq.s32.totalorder %s27, 3
      %p66 = por %p64, %p65
      %p67 = scmp.ne.s32.totalorder %s58, %s59
      %p68 = scmp.eq.s32.totalorder %s27, 0
      %p69 = por %p67, %p68
      %p70 = scmp.ne.s32.totalorder %s58, %s59
      %p71 = scmp.eq.s32.totalorder %s28, 3
      %p72 = por %p70, %p71
      %p74 = scmp.ne.s32.totalorder %s59, %s73
      %p75 = scmp.eq.s32.totalorder %s28, 0
      %p76 = por %p74, %p75
      %s78 = sadd.s32 %s77, 1
      %p81 = scmp.eq.s32.totalorder %s22, 3
      %p82 = scmp.ne.s32.totalorder %s77, %s79
      %p83 = scmp.eq.s32.totalorder %s22, 0
      %p84 = por %p82, %p83
      %p85 = scmp.ne.s32.totalorder %s77, %s79
      %p86 = scmp.eq.s32.totalorder %s27, 3
      %p87 = por %p85, %p86
      %p88 = scmp.ne.s32.totalorder %s79, %s80
      %p89 = scmp.eq.s32.totalorder %s27, 0
      %p90 = por %p88, %p89
      %p91 = scmp.ne.s32.totalorder %s79, %s80
      %p92 = scmp.eq.s32.totalorder %s28, 3
      %p93 = por %p91, %p92
      %p95 = scmp.ne.s32.totalorder %s80, %s94
      %p96 = scmp.eq.s32.totalorder %s28, 0
      %p97 = por %p95, %p96
      %s99 = sadd.s32 %s98, 1
      %p102 = scmp.eq.s32.totalorder %s22, 3
      %p103 = scmp.ne.s32.totalorder %s98, %s100
      %p104 = scmp.eq.s32.totalorder %s22, 0
      %p105 = por %p103, %p104
      %p106 = scmp.ne.s32.totalorder %s98, %s100
      %p107 = scmp.eq.s32.totalorder %s27, 3
      %p108 = por %p106, %p107
      %p109 = scmp.ne.s32.totalorder %s100, %s101
      %p110 = scmp.eq.s32.totalorder %s27, 0
      %p111 = por %p109, %p110
      %p112 = scmp.ne.s32.totalorder %s100, %s101
      %p113 = scmp.eq.s32.totalorder %s28, 3
      %p114 = por %p112, %p113
      %p116 = scmp.ne.s32.totalorder %s101, %s115
      %p117 = scmp.eq.s32.totalorder %s28, 0
      %p118 = por %p116, %p117
      %s119 = ssub.s32 %s22, %s29
      %p120 = scmp.eq.s32.totalorder %s119, 0
      %s122 = sadd.s32 %s121, 1
      %s123 = scalar_select %p120, %s121, %s122
      %p126 = pneg %p120
      %p127 = scmp.eq.s32.totalorder %s22, 3
      %p128 = por %p126, %p127
      %p129 = scmp.ne.s32.totalorder %s121, %s124
      %p130 = scmp.eq.s32.totalorder %s22, 0
      %p131 = por %p129, %p130
      %p132 = scmp.ne.s32.totalorder %s121, %s124
      %p133 = scmp.eq.s32.totalorder %s27, 3
      %p134 = por %p132, %p133
      %p135 = scmp.ne.s32.totalorder %s124, %s125
      %p136 = scmp.eq.s32.totalorder %s27, 0
      %p137 = por %p135, %p136
      %p138 = scmp.ne.s32.totalorder %s124, %s125
      %p139 = scmp.eq.s32.totalorder %s28, 3
      %p140 = por %p138, %p139
      %p142 = scmp.ne.s32.totalorder %s125, %s141
      %p143 = scmp.eq.s32.totalorder %s28, 0
      %p144 = por %p142, %p143
      %s145 = ssub.s32 %s22, %s29
      %p146 = scmp.eq.s32.totalorder %s145, 0
      %s148 = sadd.s32 %s147, 1
      %s149 = scalar_select %p146, %s147, %s148
      %p152 = pneg %p146
      %p153 = scmp.eq.s32.totalorder %s22, 3
      %p154 = por %p152, %p153
      %p155 = scmp.ne.s32.totalorder %s147, %s150
      %p156 = scmp.eq.s32.totalorder %s22, 0
      %p157 = por %p155, %p156
      %p158 = scmp.ne.s32.totalorder %s147, %s150
      %p159 = scmp.eq.s32.totalorder %s27, 3
      %p160 = por %p158, %p159
      %p161 = scmp.ne.s32.totalorder %s150, %s151
      %p162 = scmp.eq.s32.totalorder %s27, 0
      %p163 = por %p161, %p162
      %p164 = scmp.ne.s32.totalorder %s150, %s151
      %p165 = scmp.eq.s32.totalorder %s28, 3
      %p166 = por %p164, %p165
      %p168 = scmp.ne.s32.totalorder %s151, %s167
      %p169 = scmp.eq.s32.totalorder %s28, 0
      %p170 = por %p168, %p169
      %p171 = scmp.le.s32.totalorder 1, %s22
      %p172 = scmp.lt.s32.totalorder %s22, 5
      %p173 = pnand %p171, %p172
      %p174 = pneg %p173
      // Predicated region
      $region9: #{tpu_custom_call.1} parent=5 // pred_check
        _
      $region10: #{tpu_custom_call.1} parent=5 // pred_check_branch
        %176 = sbr.rel (%p173) target = $region12
      $region11: #{tpu_custom_call.1} parent=5 // pred_region
        %s177 = ssub.s32 %s22, 1
        // Predicated region
        $region13: #{tpu_custom_call.1} parent=11 // pred_check
          %p178 = pneg %p69
        $region14: #{tpu_custom_call.1} parent=11 // pred_check_branch
          %180 = sbr.rel (%p178) target = $region16
        $region15: #{tpu_custom_call.1} parent=11 // pred_region
          _
        $region16: #{tpu_custom_call.1} parent=11 // pred_fallthru
          _
        // Predicated region
        $region17: #{tpu_custom_call.1} parent=11 // pred_check
          %p181 = pneg %p90
        $region18: #{tpu_custom_call.1} parent=11 // pred_check_branch
          %183 = sbr.rel (%p181) target = $region20
        $region19: #{tpu_custom_call.1} parent=11 // pred_region
          %s185 = ssub.s32 1024, 1024
          %186 = vsyncadd [#allocation6], %s185
          %s187 = sshll.u32 [#allocation5], 4
          %s188 = int_to_ptr.vmem [resolvable:$true] %s187
          %193 = dma.hbm_to_vmem [thread:$0]  %s2, 1024, %s188, [#allocation6], 512, 512, 32
        $region20: #{tpu_custom_call.1} parent=11 // pred_fallthru
          _
        // Predicated region
        $region21: #{tpu_custom_call.1} parent=11 // pred_check
          %p194 = pneg %p111
        $region22: #{tpu_custom_call.1} parent=11 // pred_check_branch
          %196 = sbr.rel (%p194) target = $region24
        $region23: #{tpu_custom_call.1} parent=11 // pred_region
          _
        $region24: #{tpu_custom_call.1} parent=11 // pred_fallthru
          _
      $region12: #{tpu_custom_call.1} parent=5 // pred_fallthru
        _
      %p197 = scmp.lt.s32.totalorder %s22, 4
      // Predicated region
      $region25: #{tpu_custom_call.1} parent=5 // pred_check
        %p198 = pneg %p197
      $region26: #{tpu_custom_call.1} parent=5 // pred_check_branch
        %200 = sbr.rel (%p198) target = $region28
      $region27: #{tpu_custom_call.1} parent=5 // pred_region
        // Predicated region
        $region29: #{tpu_custom_call.1} parent=27 // pred_check
          %p201 = pneg %p42
        $region30: #{tpu_custom_call.1} parent=27 // pred_check_branch
          %203 = sbr.rel (%p201) target = $region32
        $region31: #{tpu_custom_call.1} parent=27 // pred_region
          %s204 = sand.u32 %s32, 1
          %s205 = scalar_lea.sflag [#allocation3], %s204
          %s206 = sand.u32 %s32, 1
          %s207 = smul.addr %s206, 64
          %s208 = scalar_lea.vmem [#allocation2], %s207
          %s209 = smul.u32 2, %s22
          %s211 = ssub.s32 1024, 1024
          %212 = vsyncadd %s205, %s211
          %s213 = smul.addr %s209, 4
          %s214 = smul.addr %s213, 128
          %s215 = scalar_lea.hbm %s0, %s214
          %s216 = sshll.u32 %s208, 4
          %s217 = int_to_ptr.vmem [resolvable:$true] %s216
          %222 = dma.hbm_to_vmem [thread:$0]  %s215, 1024, %s217, %s205, 512, 512, 32
        $region32: #{tpu_custom_call.1} parent=27 // pred_fallthru
          _
      $region28: #{tpu_custom_call.1} parent=5 // pred_fallthru
        _
      %p223 = scmp.le.s32.totalorder 1, %s22
      %p224 = scmp.lt.s32.totalorder %s22, 5
      %p225 = pnand %p223, %p224
      %p226 = pneg %p225
      // Predicated region
      $region33: #{tpu_custom_call.1} parent=5 // pred_check
        _
      $region34: #{tpu_custom_call.1} parent=5 // pred_check_branch
        %228 = sbr.rel (%p225) target = $region36
      $region35: #{tpu_custom_call.1} parent=5 // pred_region
        %s229 = ssub.s32 %s22, 1
        %s230 = sand.u32 %s35, 1
        %s231 = scalar_lea.sflag [#allocation3], %s230
        %s232 = sand.u32 %s35, 1
        %s233 = smul.addr %s232, 64
        %s234 = scalar_lea.vmem [#allocation2], %s233
        // Predicated region
        $region37: #{tpu_custom_call.1} parent=35 // pred_check
          %p235 = pneg %p48
        $region38: #{tpu_custom_call.1} parent=35 // pred_check_branch
          %237 = sbr.rel (%p235) target = $region40
        $region39: #{tpu_custom_call.1} parent=35 // pred_region
          %238 = dma.done %s231, 1024
        $region40: #{tpu_custom_call.1} parent=35 // pred_fallthru
          _
        // Predicated region
        $region41: #{tpu_custom_call.1} parent=35 // pred_check
          %p239 = pneg %p90
        $region42: #{tpu_custom_call.1} parent=35 // pred_check_branch
          %241 = sbr.rel (%p239) target = $region44
        $region43: #{tpu_custom_call.1} parent=35 // pred_region
          %242 = dma.done [#allocation6], 1024
        $region44: #{tpu_custom_call.1} parent=35 // pred_fallthru
          _
        %s243 = sand.u32 %s35, 1
        %s244 = scalar_lea.sflag [#allocation3], %s243
        %s245 = sand.u32 %s35, 1
        %s246 = smul.addr %s245, 64
        %s247 = scalar_lea.vmem [#allocation2], %s246
        %p248 = pneg %p48
        %p249 = pneg %p45
        %p250 = pneg %p69
        %p251 = pneg %p66
        %p252 = pneg %p90
        %p253 = pneg %p87
        %p254 = pneg %p111
        %p255 = pneg %p108
        %p256 = pneg %p137
        %p257 = pneg %p134
        %s258 = sand.u32 %s124, 1
        %s259 = scalar_lea.sflag [#allocation4], %s258
        %s260 = sand.u32 %s124, 1
        %s261 = smul.addr %s260, 64
        %s262 = scalar_lea.vmem [#allocation7], %s261
        %p263 = pneg %p163
        %p264 = pneg %p160
        %s265 = sand.u32 %s150, 1
        %s266 = scalar_lea.sflag [#allocation9], %s265
        %s267 = sand.u32 %s150, 1
        %s268 = smul.addr %s267, 64
        %s269 = scalar_lea.vmem [#allocation8], %s268
        %s270 = smul.u32 2, %s27
        %s271 = smul.u32 2, %s27
        %s272 = smul.u32 2, %s27
        %v273 = vld [vmem:[%s234] sm:$0xff]
        %v274 = vld [vmem:[%s234 + $0x8] sm:$0xff]
        %v275 = vld [vmem:[%s234 + $0x10] sm:$0xff]
        %v276 = vld [vmem:[%s234 + $0x18] sm:$0xff]
        %v277 = vld [vmem:[%s234 + $0x20] sm:$0xff]
        %v278 = vld [vmem:[%s234 + $0x28] sm:$0xff]
        %v279 = vld [vmem:[%s234 + $0x30] sm:$0xff]
        %v280 = vld [vmem:[%s234 + $0x38] sm:$0xff]
        %v281 = vld [vmem:[%s1] sm:$0xf]
        %v283 = vlaneseq
        %v284 = vshrl.u32 %v283, 7
        %v285 = vsub.s32 0, %v284
        %v286 = vrot.slane %v281, %v285
        %v287 = vlaneseq
        %v288 = vshrl.u32 %v287, 7
        %v289 = vsub.s32 1, %v288
        %v290 = vrot.slane %v281, %v289
        %v291 = vlaneseq
        %v292 = vshrl.u32 %v291, 7
        %v293 = vsub.s32 2, %v292
        %v294 = vrot.slane %v281, %v293
        %v295 = vlaneseq
        %v296 = vshrl.u32 %v295, 7
        %v297 = vsub.s32 3, %v296
        %v298 = vrot.slane %v281, %v297
        %v303 = vmul.f32 %v273, %v286
        %v304 = vmul.f32 %v274, %v290
        %v305 = vmul.f32 %v275, %v294
        %v306 = vmul.f32 %v276, %v298
        %v307 = vmul.f32 %v277, %v286
        %v308 = vmul.f32 %v278, %v290
        %v309 = vmul.f32 %v279, %v294
        %v310 = vmul.f32 %v280, %v298
        %v311 = vadd.f32 %v303, %v304
        %v312 = vadd.f32 %v311, %v305
        %v313 = vadd.f32 %v312, %v306
        %314 = vadd.xlane.f32.xlu0 %v313
        %v315 = vpop.xlane.xlu0 %314
        %v316 = vadd.f32 %v307, %v308
        %v317 = vadd.f32 %v316, %v309
        %v318 = vadd.f32 %v317, %v310
        %319 = vadd.xlane.f32.xlu0 %v318
        %v320 = vpop.xlane.xlu0 %319
        %v321 = vld [vmem:[%s3] sm:$0xff]
        %v322 = vld [vmem:[%s3 + $0x8] sm:$0xff]
        %v323 = vadd.f32 %v315, %v321
        %v324 = vadd.f32 %v320, %v322
        %v325 = vxor.u32 %v323, 2147483648
        %v326 = vxor.u32 %v324, 2147483648
        %v327 = vmul.f32 %v325, 1.442695
        %v328 = vpow.pop %v327
        %v329 = vmul.f32 %v326, 1.442695
        %v330 = vpow.pop %v329
        %v331 = vadd.f32 %v328, 1.0
        %v332 = vadd.f32 %v330, 1.0
        %v333 = vrcp.pop %v331
        %v334 = vmul.f32 1.0, %v333
        %v335 = vrcp.pop %v332
        %v336 = vmul.f32 1.0, %v335
        %338 = vset.pattern.permute.xlu0 0
        %339 = vperm.xlu0 %338, %v334
        %v340 = vpop.permute.xlu0 %339
        %343 = vset.pattern.permute.xlu0 0
        %344 = vperm.xlu0 %343, %v336
        %v345 = vpop.permute.xlu0 %344
        %v347 = vmul.f32 %v340, %v273
        %v348 = vmul.f32 %v340, %v274
        %v349 = vmul.f32 %v340, %v275
        %v350 = vmul.f32 %v340, %v276
        %v351 = vmul.f32 %v345, %v277
        %v352 = vmul.f32 %v345, %v278
        %v353 = vmul.f32 %v345, %v279
        %v354 = vmul.f32 %v345, %v280
        %355 = vst [vmem:[%s262] sm:$0xff] %v347
        %356 = vst [vmem:[%s262 + $0x8] sm:$0xff] %v348
        %357 = vst [vmem:[%s262 + $0x10] sm:$0xff] %v349
        %358 = vst [vmem:[%s262 + $0x18] sm:$0xff] %v350
        %359 = vst [vmem:[%s262 + $0x20] sm:$0xff] %v351
        %360 = vst [vmem:[%s262 + $0x28] sm:$0xff] %v352
        %361 = vst [vmem:[%s262 + $0x30] sm:$0xff] %v353
        %362 = vst [vmem:[%s262 + $0x38] sm:$0xff] %v354
        %v363 = vld [vmem:[#allocation5] sm:$0xff]
        %v364 = vld [vmem:[#allocation5 + $0x8] sm:$0xff]
        %v365 = vld [vmem:[#allocation5 + $0x10] sm:$0xff]
        %v366 = vld [vmem:[#allocation5 + $0x18] sm:$0xff]
        %v367 = vld [vmem:[#allocation5 + $0x20] sm:$0xff]
        %v368 = vld [vmem:[#allocation5 + $0x28] sm:$0xff]
        %v369 = vld [vmem:[#allocation5 + $0x30] sm:$0xff]
        %v370 = vld [vmem:[#allocation5 + $0x38] sm:$0xff]
        %v371 = vsub.f32 1.0, %v334
        %v372 = vsub.f32 1.0, %v336
        %374 = vset.pattern.permute.xlu0 0
        %375 = vperm.xlu0 %374, %v371
        %v376 = vpop.permute.xlu0 %375
        %379 = vset.pattern.permute.xlu0 0
        %380 = vperm.xlu0 %379, %v372
        %v381 = vpop.permute.xlu0 %380
        %v383 = vmul.f32 %v376, %v363
        %v384 = vmul.f32 %v376, %v364
        %v385 = vmul.f32 %v376, %v365
        %v386 = vmul.f32 %v376, %v366
        %v387 = vmul.f32 %v381, %v367
        %v388 = vmul.f32 %v381, %v368
        %v389 = vmul.f32 %v381, %v369
        %v390 = vmul.f32 %v381, %v370
        %391 = vst [vmem:[%s269] sm:$0xff] %v383
        %392 = vst [vmem:[%s269 + $0x8] sm:$0xff] %v384
        %393 = vst [vmem:[%s269 + $0x10] sm:$0xff] %v385
        %394 = vst [vmem:[%s269 + $0x18] sm:$0xff] %v386
        %395 = vst [vmem:[%s269 + $0x20] sm:$0xff] %v387
        %396 = vst [vmem:[%s269 + $0x28] sm:$0xff] %v388
        %397 = vst [vmem:[%s269 + $0x30] sm:$0xff] %v389
        %398 = vst [vmem:[%s269 + $0x38] sm:$0xff] %v390
        %s399 = sand.u32 %s124, 1
        %s400 = scalar_lea.sflag [#allocation4], %s399
        %s401 = sand.u32 %s124, 1
        %s402 = smul.addr %s401, 64
        %s403 = scalar_lea.vmem [#allocation7], %s402
        %s404 = sand.u32 %s150, 1
        %s405 = scalar_lea.sflag [#allocation9], %s404
        %s406 = sand.u32 %s150, 1
        %s407 = smul.addr %s406, 64
        %s408 = scalar_lea.vmem [#allocation8], %s407
        // Predicated region
        $region45: #{tpu_custom_call.1} parent=35 // pred_check
          %p409 = pneg %p134
        $region46: #{tpu_custom_call.1} parent=35 // pred_check_branch
          %411 = sbr.rel (%p409) target = $region48
        $region47: #{tpu_custom_call.1} parent=35 // pred_region
          %s412 = smul.u32 2, %s27
          %s414 = ssub.s32 1024, 1024
          %415 = vsyncadd %s400, %s414
          %s416 = smul.addr %s412, 4
          %s417 = smul.addr %s416, 128
          %s418 = scalar_lea.hbm %s4, %s417
          %s419 = sshll.u32 %s403, 4
          %s420 = int_to_ptr.vmem [resolvable:$true] %s419
          %425 = dma.vmem_to_hbm [thread:$0]  %s420, 1024, %s418, %s400, 512, 512, 32
        $region48: #{tpu_custom_call.1} parent=35 // pred_fallthru
          _
        // Predicated region
        $region49: #{tpu_custom_call.1} parent=35 // pred_check
          %p426 = pneg %p160
        $region50: #{tpu_custom_call.1} parent=35 // pred_check_branch
          %428 = sbr.rel (%p426) target = $region52
        $region51: #{tpu_custom_call.1} parent=35 // pred_region
          %s429 = smul.u32 2, %s27
          %s431 = ssub.s32 1024, 1024
          %432 = vsyncadd %s405, %s431
          %s433 = smul.addr %s429, 4
          %s434 = smul.addr %s433, 128
          %s435 = scalar_lea.hbm %s5, %s434
          %s436 = sshll.u32 %s408, 4
          %s437 = int_to_ptr.vmem [resolvable:$true] %s436
          %442 = dma.vmem_to_hbm [thread:$0]  %s437, 1024, %s435, %s405, 512, 512, 32
        $region52: #{tpu_custom_call.1} parent=35 // pred_fallthru
          _
      $region36: #{tpu_custom_call.1} parent=5 // pred_fallthru
        _
      %p443 = scmp.le.s32.totalorder 2, %s22
      // Predicated region
      $region53: #{tpu_custom_call.1} parent=5 // pred_check
        %p444 = pneg %p443
      $region54: #{tpu_custom_call.1} parent=5 // pred_check_branch
        %446 = sbr.rel (%p444) target = $region56
      $region55: #{tpu_custom_call.1} parent=5 // pred_region
        %s447 = ssub.s32 %s22, 2
        // Predicated region
        $region57: #{tpu_custom_call.1} parent=55 // pred_check
          %p448 = pneg %p140
        $region58: #{tpu_custom_call.1} parent=55 // pred_check_branch
          %450 = sbr.rel (%p448) target = $region60
        $region59: #{tpu_custom_call.1} parent=55 // pred_region
          %s451 = sand.u32 %s125, 1
          %s452 = scalar_lea.sflag [#allocation4], %s451
          %s453 = sand.u32 %s125, 1
          %s454 = smul.addr %s453, 64
          %s455 = scalar_lea.vmem [#allocation7], %s454
          %456 = dma.done %s452, 1024
        $region60: #{tpu_custom_call.1} parent=55 // pred_fallthru
          _
        // Predicated region
        $region61: #{tpu_custom_call.1} parent=55 // pred_check
          %p457 = pneg %p166
        $region62: #{tpu_custom_call.1} parent=55 // pred_check_branch
          %459 = sbr.rel (%p457) target = $region64
        $region63: #{tpu_custom_call.1} parent=55 // pred_region
          %s460 = sand.u32 %s151, 1
          %s461 = scalar_lea.sflag [#allocation9], %s460
          %s462 = sand.u32 %s151, 1
          %s463 = smul.addr %s462, 64
          %s464 = scalar_lea.vmem [#allocation8], %s463
          %465 = dma.done %s461, 1024
        $region64: #{tpu_custom_call.1} parent=55 // pred_fallthru
          _
      $region56: #{tpu_custom_call.1} parent=5 // pred_fallthru
        _
    $region6: #{tpu_custom_call.1} parent=1 // loop_footer
      %s26 = sadd.s32 1, %s22
    $region7: #{tpu_custom_call.1} parent=1 // loop_footer_branch
      %21 = sbr.rel target = $region3
    $region8: #{tpu_custom_call.1} parent=1 // loop_exit
      _
    %466 = vsyncpa [#allocation3], 1
    %s467 = scalar_lea.sflag [#allocation3], 1
    %468 = vsyncpa %s467, 1
    %469 = vsyncpa [#allocation6], 1
    %470 = vsyncpa [#allocation4], 1
    %s471 = scalar_lea.sflag [#allocation4], 1
    %472 = vsyncpa %s471, 1
    %473 = vsyncpa [#allocation9], 1
    %s474 = scalar_lea.sflag [#allocation9], 1
    %475 = vsyncpa %s474, 1

</llo_original>
